<compile_context>
chip_gen: v6e
topology: v6e:2x2x1
jax: 0.10.0
libtpu: 0.0.40
codegen_flags: <defaults>
</compile_context>

<pallas_src>
import jax
import jax.numpy as jnp
from jax import lax
from jax.experimental import pallas as pl
from jax.experimental.pallas import tpu as pltpu


_TARGET_STEP_BYTES = 4 * 1024 * 1024   # streamed input bytes per grid step


def _round_up(x, m):
    return (x + m - 1) // m * m


def _vmem_budgets():
    """(double-buffered input budget, vmem_limit_bytes), generation-aware."""
    cap = None
    try:
        cap = getattr(pltpu.get_tpu_info(), "vmem_capacity_bytes", None)
    except Exception:
        cap = None
    if cap is None or cap <= 64 * 1024 * 1024:       # v7x-class: 64 MiB / TC
        return 20 * 1024 * 1024, 48 * 1024 * 1024
    return 48 * 1024 * 1024, 64 * 1024 * 1024        # v5e / v6e: 128 MiB


def _choose_tile_s(S, per_lane_bytes, input_budget):
    """Spatial tile (lanes): ~4 MiB of streamed input per step, bounded by
    the double-buffered input VMEM budget; multiple of 128."""
    lanes = min(_TARGET_STEP_BYTES, input_budget // 2) // max(per_lane_bytes, 1)
    lanes = max(128, (lanes // 128) * 128)
    return int(min(lanes, _round_up(S, 128)))


def dice_loss(pred, target, eps=1e-05, *, _tile_s_override=None):
    """Pallas equivalent of DiceLoss.forward (returns a scalar)."""
    if target.ndim == 3:
        target = target[:, None]                     # [N, 1, H, W] (virtual bcast)
    if target.dtype == jnp.bool_:
        target = target.astype(jnp.bfloat16)         # exact for {0,1}; halves bytes

    N, C, H, W = pred.shape
    Ct = target.shape[1]                              # 1 (broadcast) or C
    S = H * W

    pred3 = pred.reshape(N, C, S)
    targ3 = target.reshape(N, Ct, S)

    input_budget, vmem_limit = _vmem_budgets()
    per_lane_bytes = C * pred3.dtype.itemsize + Ct * targ3.dtype.itemsize
    tile_s = (_tile_s_override if _tile_s_override is not None
              else _choose_tile_s(S, per_lane_bytes, input_budget))

    num_s = -(-S // tile_s)                           # cdiv, no padding in HBM
    # v7x has 2 TensorCores: when N is odd (e.g. N==1) split the spatial
    # reduction across a second parallel axis so neither core idles.
    num_splits = 2 if (N % 2 == 1 and num_s >= 2) else 1
    num_s_per_split = -(-num_s // num_splits)
    overshoot = num_splits * num_s_per_split != num_s
    needs_mask = (S % tile_s != 0) or overshoot
    broadcast_t = (Ct == 1)

    def spatial_block(h, s):
        gb = h * num_s_per_split + s
        if overshoot:
            gb = jnp.minimum(gb, num_s - 1)           # never index a fully-OOB block
        return gb

    def kernel(pred_ref, targ_ref, inter_ref, union_ref):
        h = pl.program_id(1)
        s = pl.program_id(2)

        @pl.when(s == 0)
        def _():
            inter_ref[...] = jnp.zeros_like(inter_ref)
            union_ref[...] = jnp.zeros_like(union_ref)

        x = pred_ref[...].astype(jnp.float32)         # (C, tile_s)
        # One EUP transcendental per element: sigmoid(x) = 0.5*tanh(0.5x)+0.5
        p = 0.5 * jnp.tanh(0.5 * x) + 0.5
        t = targ_ref[...].astype(jnp.float32)         # (Ct, tile_s)

        if needs_mask:
            gb = h * num_s_per_split + s              # un-clamped global block idx
            remaining = S - gb * tile_s               # <=0 for fully-OOB blocks
            lane_p = lax.broadcasted_iota(jnp.int32, p.shape, 1)
            lane_t = lax.broadcasted_iota(jnp.int32, t.shape, 1)
            p = jnp.where(lane_p < remaining, p, 0.0)
            t = jnp.where(lane_t < remaining, t, 0.0)

        inter_ref[...] += jnp.sum(p * t, axis=-1, keepdims=True)
        if broadcast_t:
            # target broadcasts over C: add its scalar sum once per channel,
            # avoiding the (C, tile_s) p + t temporary.
            union_ref[...] += (jnp.sum(p, axis=-1, keepdims=True)
                               + jnp.sum(t, axis=-1, keepdims=True))
        else:
            # union = sum(p) + sum(t) == sum(p + t): one cross-lane reduce.
            union_ref[...] += jnp.sum(p + t, axis=-1, keepdims=True)

    out_bytes = 2 * N * num_splits * C * 4
    cost = pl.CostEstimate(
        flops=int(4 * N * C * S),
        transcendentals=int(N * C * S),
        bytes_accessed=int(pred3.size * pred3.dtype.itemsize
                           + targ3.size * targ3.dtype.itemsize + out_bytes),
    )

    inter, union = pl.pallas_call(
        kernel,
        out_shape=(
            jax.ShapeDtypeStruct((N, num_splits, C, 1), jnp.float32),
            jax.ShapeDtypeStruct((N, num_splits, C, 1), jnp.float32),
        ),
        grid=(N, num_splits, num_s_per_split),
        in_specs=[
            pl.BlockSpec((None, C, tile_s),
                         lambda n, h, s: (n, 0, spatial_block(h, s))),
            pl.BlockSpec((None, Ct, tile_s),
                         lambda n, h, s: (n, 0, spatial_block(h, s))),
        ],
        out_specs=(
            pl.BlockSpec((None, None, C, 1), lambda n, h, s: (n, h, 0, 0)),
            pl.BlockSpec((None, None, C, 1), lambda n, h, s: (n, h, 0, 0)),
        ),
        compiler_params=pltpu.CompilerParams(
            dimension_semantics=("parallel", "parallel", "arbitrary"),
            vmem_limit_bytes=vmem_limit,
        ),
        cost_estimate=cost,
    )(pred3, targ3)

    # Tiny pure-JAX epilogue over N * num_splits * C scalars.
    inter = jnp.sum(inter[..., 0], axis=1)            # (N, C)
    union = jnp.sum(union[..., 0], axis=1)
    dice = (2.0 * inter + eps) / (union + eps)
    return 1.0 - jnp.mean(dice)


def _dice_loss_ref(pred, target, eps=1e-05):
    """Pure-JAX reference mirroring the PyTorch module."""
    pred = jax.nn.sigmoid(pred)
    if target.ndim == 3:
        target = target[:, None, :, :]
    target = target.astype(pred.dtype)
    intersection = jnp.sum(pred * target, axis=(2, 3))
    union = jnp.sum(pred, axis=(2, 3)) + jnp.sum(target, axis=(2, 3))
    dice = (2.0 * intersection + eps) / (union + eps)
    return 1.0 - jnp.mean(dice)


if __name__ == "__main__":
    key = jax.random.PRNGKey(0)
    k1, k2, k3, k4 = jax.random.split(key, 4)

    N, C, H, W = 2, 4, 16, 16
    pred = jax.random.normal(k1, (N, C, H, W), dtype=jnp.float32)
    target4 = (jax.random.uniform(k2, (N, C, H, W)) > 0.5).astype(jnp.float32)
    target3 = (jax.random.uniform(k3, (N, H, W)) > 0.5).astype(jnp.float32)

    # Per-channel float target (same shape as pred).
    loss4 = jax.block_until_ready(dice_loss(pred, target4))
    ref4 = jax.block_until_ready(_dice_loss_ref(pred, target4))
    assert jnp.allclose(loss4, ref4, atol=1e-5, rtol=1e-5), (loss4, ref4)

    # 3-D mask target (broadcast over channels, never materialized in HBM).
    loss3 = jax.block_until_ready(dice_loss(pred, target3))
    ref3 = jax.block_until_ready(_dice_loss_ref(pred, target3))
    assert jnp.allclose(loss3, ref3, atol=1e-5, rtol=1e-5), (loss3, ref3)

    # Boolean mask target -> streamed as bf16 (exact for {0,1}).
    loss3b = jax.block_until_ready(dice_loss(pred, target3.astype(bool)))
    assert jnp.allclose(loss3b, ref3, atol=1e-5, rtol=1e-5), (loss3b, ref3)

    # Odd-N split + ragged spatial tail path (forced small tile to exercise
    # the in-kernel lane mask and the clamped overshoot block).
    Np, Cp, Hp, Wp = 1, 2, 8, 48
    pred_p = jax.random.normal(k4, (Np, Cp, Hp, Wp), dtype=jnp.float32)
    targ_p = (jax.random.uniform(k2, (Np, Hp, Wp)) > 0.5).astype(jnp.float32)
    loss_p = jax.block_until_ready(dice_loss(pred_p, targ_p, _tile_s_override=128))
    ref_p = jax.block_until_ready(_dice_loss_ref(pred_p, targ_p))
    assert jnp.allclose(loss_p, ref_p, atol=1e-5, rtol=1e-5), (loss_p, ref_p)

    print("KERNEL_OK")
</pallas_src>

<mosaic_0001>
module attributes {stable_mosaic.version = 11 : i64} {
  func.func @kernel(%arg0: i32, %arg1: i32, %arg2: i32, %arg3: memref<1x4x256xf32, #tpu.memory_space<vmem>>, %arg4: memref<1x4x256xf32, #tpu.memory_space<vmem>>, %arg5: memref<1x1x4x1xf32, #tpu.memory_space<vmem>>, %arg6: memref<1x1x4x1xf32, #tpu.memory_space<vmem>>) attributes {dimension_semantics = [#tpu.dimension_semantics<parallel>, #tpu.dimension_semantics<parallel>, #tpu.dimension_semantics<arbitrary>], iteration_bounds = array<i64: 2, 1, 1>, scalar_prefetch = 0 : i64, scratch_operands = 0 : i64, tpu.core_type = #tpu.core_type<tc>, window_params = [{transform_indices = @transform_0, window_bounds = array<i64: 1, 4, 256>}, {transform_indices = @transform_1, window_bounds = array<i64: 1, 4, 256>}, {transform_indices = @transform_2, window_bounds = array<i64: 1, 1, 4, 1>}, {transform_indices = @transform_3, window_bounds = array<i64: 1, 1, 4, 1>}]} {
    %c0_i32 = arith.constant 0 : i32
    %0 = arith.cmpi eq, %arg2, %c0_i32 : i32
    %1 = arith.extui %0 : i1 to i32
    %c0_i32_0 = arith.constant 0 : i32
    %2 = arith.cmpi ne, %1, %c0_i32_0 : i32
    scf.if %2 {
      %cst_26 = arith.constant 0.000000e+00 : f32
      %32 = vector.broadcast %cst_26 : f32 to vector<4x1xf32>
      %c0_27 = arith.constant 0 : index
      %c0_28 = arith.constant 0 : index
      %c0_29 = arith.constant 0 : index
      %c0_30 = arith.constant 0 : index
      %33 = vector.load %arg5[%c0_27, %c0_28, %c0_29, %c0_30] : memref<1x1x4x1xf32, #tpu.memory_space<vmem>>, vector<1x1x4x1xf32>
      %34 = vector.shape_cast %33 : vector<1x1x4x1xf32> to vector<4x1xf32>
      %35 = vector.shape_cast %32 : vector<4x1xf32> to vector<1x1x4x1xf32>
      tpu.vector_store %arg5[%c0_27, %c0_28, %c0_29, %c0_30], %35 {strides = array<i32>} : memref<1x1x4x1xf32, #tpu.memory_space<vmem>>, vector<1x1x4x1xf32>,
      %cst_31 = arith.constant 0.000000e+00 : f32
      %36 = vector.broadcast %cst_31 : f32 to vector<4x1xf32>
      %c0_32 = arith.constant 0 : index
      %c0_33 = arith.constant 0 : index
      %c0_34 = arith.constant 0 : index
      %c0_35 = arith.constant 0 : index
      %37 = vector.load %arg6[%c0_32, %c0_33, %c0_34, %c0_35] : memref<1x1x4x1xf32, #tpu.memory_space<vmem>>, vector<1x1x4x1xf32>
      %38 = vector.shape_cast %37 : vector<1x1x4x1xf32> to vector<4x1xf32>
      %39 = vector.shape_cast %36 : vector<4x1xf32> to vector<1x1x4x1xf32>
      tpu.vector_store %arg6[%c0_32, %c0_33, %c0_34, %c0_35], %39 {strides = array<i32>} : memref<1x1x4x1xf32, #tpu.memory_space<vmem>>, vector<1x1x4x1xf32>,
    } else {
    }
    %c0 = arith.constant 0 : index
    %c0_1 = arith.constant 0 : index
    %c0_2 = arith.constant 0 : index
    %3 = vector.load %arg3[%c0, %c0_1, %c0_2] : memref<1x4x256xf32, #tpu.memory_space<vmem>>, vector<1x4x256xf32>
    %4 = vector.shape_cast %3 : vector<1x4x256xf32> to vector<4x256xf32>
    %cst = arith.constant 5.000000e-01 : f32
    %5 = vector.broadcast %cst : f32 to vector<4x256xf32>
    %6 = arith.mulf %5, %4 : vector<4x256xf32>
    %7 = math.tanh %6 : vector<4x256xf32>
    %cst_3 = arith.constant 5.000000e-01 : f32
    %8 = vector.broadcast %cst_3 : f32 to vector<4x256xf32>
    %9 = arith.mulf %8, %7 : vector<4x256xf32>
    %cst_4 = arith.constant 5.000000e-01 : f32
    %10 = vector.broadcast %cst_4 : f32 to vector<4x256xf32>
    %11 = arith.addf %9, %10 : vector<4x256xf32>
    %c0_5 = arith.constant 0 : index
    %c0_6 = arith.constant 0 : index
    %c0_7 = arith.constant 0 : index
    %12 = vector.load %arg4[%c0_5, %c0_6, %c0_7] : memref<1x4x256xf32, #tpu.memory_space<vmem>>, vector<1x4x256xf32>
    %13 = vector.shape_cast %12 : vector<1x4x256xf32> to vector<4x256xf32>
    %c0_8 = arith.constant 0 : index
    %c0_9 = arith.constant 0 : index
    %c0_10 = arith.constant 0 : index
    %c0_11 = arith.constant 0 : index
    %14 = vector.load %arg5[%c0_8, %c0_9, %c0_10, %c0_11] : memref<1x1x4x1xf32, #tpu.memory_space<vmem>>, vector<1x1x4x1xf32>
    %15 = vector.shape_cast %14 : vector<1x1x4x1xf32> to vector<4x1xf32>
    %16 = arith.mulf %11, %13 : vector<4x256xf32>
    %cst_12 = arith.constant dense<0.000000e+00> : vector<4xf32>
    %17 = vector.multi_reduction <add>, %16, %cst_12 [1] : vector<4x256xf32> to vector<4xf32>
    %18 = vector.shape_cast %17 : vector<4xf32> to vector<4x1xf32>
    %19 = arith.addf %15, %18 : vector<4x1xf32>
    %c0_13 = arith.constant 0 : index
    %c0_14 = arith.constant 0 : index
    %c0_15 = arith.constant 0 : index
    %c0_16 = arith.constant 0 : index
    %20 = vector.load %arg5[%c0_13, %c0_14, %c0_15, %c0_16] : memref<1x1x4x1xf32, #tpu.memory_space<vmem>>, vector<1x1x4x1xf32>
    %21 = vector.shape_cast %20 : vector<1x1x4x1xf32> to vector<4x1xf32>
    %22 = vector.shape_cast %19 : vector<4x1xf32> to vector<1x1x4x1xf32>
    tpu.vector_store %arg5[%c0_13, %c0_14, %c0_15, %c0_16], %22 {strides = array<i32>} : memref<1x1x4x1xf32, #tpu.memory_space<vmem>>, vector<1x1x4x1xf32>,
    %c0_17 = arith.constant 0 : index
    %c0_18 = arith.constant 0 : index
    %c0_19 = arith.constant 0 : index
    %c0_20 = arith.constant 0 : index
    %23 = vector.load %arg6[%c0_17, %c0_18, %c0_19, %c0_20] : memref<1x1x4x1xf32, #tpu.memory_space<vmem>>, vector<1x1x4x1xf32>
    %24 = vector.shape_cast %23 : vector<1x1x4x1xf32> to vector<4x1xf32>
    %25 = arith.addf %11, %13 : vector<4x256xf32>
    %cst_21 = arith.constant dense<0.000000e+00> : vector<4xf32>
    %26 = vector.multi_reduction <add>, %25, %cst_21 [1] : vector<4x256xf32> to vector<4xf32>
    %27 = vector.shape_cast %26 : vector<4xf32> to vector<4x1xf32>
    %28 = arith.addf %24, %27 : vector<4x1xf32>
    %c0_22 = arith.constant 0 : index
    %c0_23 = arith.constant 0 : index
    %c0_24 = arith.constant 0 : index
    %c0_25 = arith.constant 0 : index
    %29 = vector.load %arg6[%c0_22, %c0_23, %c0_24, %c0_25] : memref<1x1x4x1xf32, #tpu.memory_space<vmem>>, vector<1x1x4x1xf32>
    %30 = vector.shape_cast %29 : vector<1x1x4x1xf32> to vector<4x1xf32>
    %31 = vector.shape_cast %28 : vector<4x1xf32> to vector<1x1x4x1xf32>
    tpu.vector_store %arg6[%c0_22, %c0_23, %c0_24, %c0_25], %31 {strides = array<i32>} : memref<1x1x4x1xf32, #tpu.memory_space<vmem>>, vector<1x1x4x1xf32>,
    return
  }
  func.func @transform_0(%arg0: i32, %arg1: i32, %arg2: i32) -> (i32, i32, i32) {
    %c1_i32 = arith.constant 1 : i32
    %0 = arith.muli %arg1, %c1_i32 : i32
    %1 = arith.addi %0, %arg2 : i32
    %c0_i32 = arith.constant 0 : i32
    %c0_i32_0 = arith.constant 0 : i32
    return %arg0, %c0_i32, %1 : i32, i32, i32
  }
  func.func @transform_1(%arg0: i32, %arg1: i32, %arg2: i32) -> (i32, i32, i32) {
    %c1_i32 = arith.constant 1 : i32
    %0 = arith.muli %arg1, %c1_i32 : i32
    %1 = arith.addi %0, %arg2 : i32
    %c0_i32 = arith.constant 0 : i32
    %c0_i32_0 = arith.constant 0 : i32
    return %arg0, %c0_i32, %1 : i32, i32, i32
  }
  func.func @transform_2(%arg0: i32, %arg1: i32, %arg2: i32) -> (i32, i32, i32, i32) {
    %c0_i32 = arith.constant 0 : i32
    %c0_i32_0 = arith.constant 0 : i32
    %c0_i32_1 = arith.constant 0 : i32
    return %arg0, %arg1, %c0_i32, %c0_i32_0 : i32, i32, i32, i32
  }
  func.func @transform_3(%arg0: i32, %arg1: i32, %arg2: i32) -> (i32, i32, i32, i32) {
    %c0_i32 = arith.constant 0 : i32
    %c0_i32_0 = arith.constant 0 : i32
    %c0_i32_1 = arith.constant 0 : i32
    return %arg0, %arg1, %c0_i32, %c0_i32_0 : i32, i32, i32, i32
  }
}

</mosaic_0001>

<llo_original>
// kernel: tpu_custom_call.1
$region0: #{tpu_custom_call.1}
  #allocation0 [shape = 'u32[]', space=smem, size = 0x4, offset = 0x4, fixed_abs, tag = 'smem constant byte address 0x4 - core index']
  #allocation1 [shape = 'u32[144,128]{1,0:T(1,128)}', space=vmem, size = 0x12000, scoped, tag = 'internal scratch']
  %s0 = inlined_call_operand.hbm [shape: f32[2,4,256], index: 0, kind: input, shape index: {}]
  %s1 = inlined_call_operand.hbm [shape: f32[2,4,256], index: 1, kind: input, shape index: {}]
  %s2 = inlined_call_operand.vmem [shape: f32[2,1,4,1], index: 2, kind: output, shape index: {0}]
  %s3 = inlined_call_operand.vmem [shape: f32[2,1,4,1], index: 3, kind: output, shape index: {1}]
  %4 = xla_tuple %s2, %s3
  %s5 = sld [smem:[#allocation0]]
  $region61: #{tpu_custom_call.1} parent=0
    _
  %s7 = ssub.s32 1, %s5
  %s8 = scalar_select 0, %s7, %s5
  $region1: #{tpu_custom_call.1} parent=0
    #allocation2 [shape = 'u8[8192]{0}', space=vmem, size = 0x2000, scoped, tag = 'input window, operand 0']
    #allocation3 [shape = 's32[2]{0}', space=sflag, size = 0x8, scoped, tag = 'scoped memory for tpu_custom_call.1']
    #allocation4 [shape = 'u8[8192]{0}', space=vmem, size = 0x2000, scoped, tag = 'input window, operand 1']
    #allocation5 [shape = 's32[2]{0}', space=sflag, size = 0x8, scoped, tag = 'scoped memory for tpu_custom_call.1']
    %9 = vsyncpa [#allocation3], 0
    %s10 = scalar_lea.sflag [#allocation3], 1
    %11 = vsyncpa %s10, 0
    %12 = vsyncpa [#allocation5], 0
    %s13 = scalar_lea.sflag [#allocation5], 1
    %14 = vsyncpa %s13, 0
    loop: start=0, step=1, limit=4
    $region2: #{tpu_custom_call.1} parent=1 // loop_pre_header
      _
    $region3: #{tpu_custom_call.1} parent=1 // loop_header
      %s16 = sphi 0, %s20
      %p17 = scmp.ge.s32.totalorder %s16, 4
      %s23 = sphi 0, %s42
      %s24 = sphi 0, %s38
      %s25 = sphi 0, %s34
      %s26 = sphi 0, %s23
      %s27 = sphi 0, %s24
      %s28 = sphi 0, %s25
      %s29 = sphi 0, %s26
      %s30 = sphi 0, %s27
      %s31 = sphi 0, %s28
      %s49 = sphi 0, %s51
      %s52 = sphi 0, %s49
      %s53 = sphi 0, %s52
      %s69 = sphi 0, %s53
      %s79 = sphi 0, %s81
      %s82 = sphi 0, %s79
      %s83 = sphi 0, %s82
      %s99 = sphi 0, %s83
      %s107 = sphi 0, %s109
      %s110 = sphi 0, %s107
      %s111 = sphi 0, %s110
      %s127 = sphi 0, %s111
      %s135 = sphi 0, %s137
      %s138 = sphi 0, %s135
      %s139 = sphi 0, %s138
      %s155 = sphi 0, %s139
    $region4: #{tpu_custom_call.1} parent=1 // loop_header_branch
      %19 = sbr.rel (%p17) target = $region8
    $region5: #{tpu_custom_call.1} parent=1 // loop_body
      %s21 = ssub.s32 %s16, 1
      %s22 = ssub.s32 %s16, 2
      %s32 = sadd.s32 1, %s25
      %p33 = scmp.ge.s32.totalorder %s32, 1
      %s34 = scalar_select %p33, 0, %s32
      %s35 = sadd.s32 1, %s24
      %s36 = scalar_select %p33, %s35, %s24
      %p37 = scmp.ge.s32.totalorder %s36, 1
      %s38 = scalar_select %p37, 0, %s36
      %s39 = sadd.s32 1, %s23
      %s40 = scalar_select %p37, %s39, %s23
      %p41 = scmp.ge.s32.totalorder %s40, 2
      %s42 = scalar_select %p41, 0, %s40
      %s43 = sadd.s32 %s24, %s25
      %s44 = sadd.s32 %s38, %s34
      %s45 = ssub.s32 %s23, %s42
      %s46 = ssub.s32 %s43, %s44
      %s47 = sor.u32 %s45, %s46
      %p48 = scmp.eq.s32.totalorder %s47, 0
      %s50 = sadd.s32 %s49, 1
      %s51 = scalar_select %p48, %s49, %s50
      %p54 = pneg %p48
      %p55 = scmp.eq.s32.totalorder %s16, 1
      %p56 = por %p54, %p55
      %p57 = scmp.ne.s32.totalorder %s49, %s52
      %p58 = scmp.eq.s32.totalorder %s16, 0
      %p59 = por %p57, %p58
      %p60 = scmp.ne.s32.totalorder %s49, %s52
      %p61 = scmp.eq.s32.totalorder %s21, 1
      %p62 = por %p60, %p61
      %p63 = scmp.ne.s32.totalorder %s52, %s53
      %p64 = scmp.eq.s32.totalorder %s21, 0
      %p65 = por %p63, %p64
      %p66 = scmp.ne.s32.totalorder %s52, %s53
      %p67 = scmp.eq.s32.totalorder %s22, 1
      %p68 = por %p66, %p67
      %p70 = scmp.ne.s32.totalorder %s53, %s69
      %p71 = scmp.eq.s32.totalorder %s22, 0
      %p72 = por %p70, %p71
      %s73 = sadd.s32 %s24, %s25
      %s74 = sadd.s32 %s38, %s34
      %s75 = ssub.s32 %s23, %s42
      %s76 = ssub.s32 %s73, %s74
      %s77 = sor.u32 %s75, %s76
      %p78 = scmp.eq.s32.totalorder %s77, 0
      %s80 = sadd.s32 %s79, 1
      %s81 = scalar_select %p78, %s79, %s80
      %p84 = pneg %p78
      %p85 = scmp.eq.s32.totalorder %s16, 1
      %p86 = por %p84, %p85
      %p87 = scmp.ne.s32.totalorder %s79, %s82
      %p88 = scmp.eq.s32.totalorder %s16, 0
      %p89 = por %p87, %p88
      %p90 = scmp.ne.s32.totalorder %s79, %s82
      %p91 = scmp.eq.s32.totalorder %s21, 1
      %p92 = por %p90, %p91
      %p93 = scmp.ne.s32.totalorder %s82, %s83
      %p94 = scmp.eq.s32.totalorder %s21, 0
      %p95 = por %p93, %p94
      %p96 = scmp.ne.s32.totalorder %s82, %s83
      %p97 = scmp.eq.s32.totalorder %s22, 1
      %p98 = por %p96, %p97
      %p100 = scmp.ne.s32.totalorder %s83, %s99
      %p101 = scmp.eq.s32.totalorder %s22, 0
      %p102 = por %p100, %p101
      %s103 = ssub.s32 %s23, %s42
      %s104 = ssub.s32 %s24, %s38
      %s105 = sor.u32 %s103, %s104
      %p106 = scmp.eq.s32.totalorder %s105, 0
      %s108 = sadd.s32 %s107, 1
      %s109 = scalar_select %p106, %s107, %s108
      %p112 = pneg %p106
      %p113 = scmp.eq.s32.totalorder %s16, 1
      %p114 = por %p112, %p113
      %p115 = scmp.ne.s32.totalorder %s107, %s110
      %p116 = scmp.eq.s32.totalorder %s16, 0
      %p117 = por %p115, %p116
      %p118 = scmp.ne.s32.totalorder %s107, %s110
      %p119 = scmp.eq.s32.totalorder %s21, 1
      %p120 = por %p118, %p119
      %p121 = scmp.ne.s32.totalorder %s110, %s111
      %p122 = scmp.eq.s32.totalorder %s21, 0
      %p123 = por %p121, %p122
      %p124 = scmp.ne.s32.totalorder %s110, %s111
      %p125 = scmp.eq.s32.totalorder %s22, 1
      %p126 = por %p124, %p125
      %p128 = scmp.ne.s32.totalorder %s111, %s127
      %p129 = scmp.eq.s32.totalorder %s22, 0
      %p130 = por %p128, %p129
      %s131 = ssub.s32 %s23, %s42
      %s132 = ssub.s32 %s24, %s38
      %s133 = sor.u32 %s131, %s132
      %p134 = scmp.eq.s32.totalorder %s133, 0
      %s136 = sadd.s32 %s135, 1
      %s137 = scalar_select %p134, %s135, %s136
      %p140 = pneg %p134
      %p141 = scmp.eq.s32.totalorder %s16, 1
      %p142 = por %p140, %p141
      %p143 = scmp.ne.s32.totalorder %s135, %s138
      %p144 = scmp.eq.s32.totalorder %s16, 0
      %p145 = por %p143, %p144
      %p146 = scmp.ne.s32.totalorder %s135, %s138
      %p147 = scmp.eq.s32.totalorder %s21, 1
      %p148 = por %p146, %p147
      %p149 = scmp.ne.s32.totalorder %s138, %s139
      %p150 = scmp.eq.s32.totalorder %s21, 0
      %p151 = por %p149, %p150
      %p152 = scmp.ne.s32.totalorder %s138, %s139
      %p153 = scmp.eq.s32.totalorder %s22, 1
      %p154 = por %p152, %p153
      %p156 = scmp.ne.s32.totalorder %s139, %s155
      %p157 = scmp.eq.s32.totalorder %s22, 0
      %p158 = por %p156, %p157
      %p159 = scmp.le.s32.totalorder 1, %s16
      %p160 = scmp.lt.s32.totalorder %s16, 3
      %p161 = pnand %p159, %p160
      %p162 = pneg %p161
      // Predicated region
      $region9: #{tpu_custom_call.1} parent=5 // pred_check
        _
      $region10: #{tpu_custom_call.1} parent=5 // pred_check_branch
        %164 = sbr.rel (%p161) target = $region12
      $region11: #{tpu_custom_call.1} parent=5 // pred_region
        %s165 = ssub.s32 %s16, 1
      $region12: #{tpu_custom_call.1} parent=5 // pred_fallthru
        _
      %p166 = scmp.lt.s32.totalorder %s16, 2
      // Predicated region
      $region13: #{tpu_custom_call.1} parent=5 // pred_check
        %p167 = pneg %p166
      $region14: #{tpu_custom_call.1} parent=5 // pred_check_branch
        %169 = sbr.rel (%p167) target = $region16
      $region15: #{tpu_custom_call.1} parent=5 // pred_region
        // Predicated region
        $region17: #{tpu_custom_call.1} parent=15 // pred_check
          %p170 = pneg %p59
        $region18: #{tpu_custom_call.1} parent=15 // pred_check_branch
          %172 = sbr.rel (%p170) target = $region20
        $region19: #{tpu_custom_call.1} parent=15 // pred_region
          %s173 = sand.u32 %s49, 1
          %s174 = scalar_lea.sflag [#allocation3], %s173
          %s175 = sand.u32 %s49, 1
          %s176 = smul.addr %s175, 8
          %s177 = scalar_lea.vmem [#allocation2], %s176
          %s178 = sadd.s32 %s24, %s25
          %s179 = smul.u32 2, %s178
          %s181 = ssub.s32 128, 128
          %182 = vsyncadd %s174, %s181
          %s183 = smul.addr %s23, 2
          %s184 = sadd.s32 %s179, %s183
          %s185 = smul.addr %s184, 64
          %s186 = scalar_lea.hbm %s0, %s185
          %s188 = sshll.u32 %s177, 4
          %s189 = int_to_ptr.vmem [resolvable:$true] %s188
          %191 = dma.hbm_to_vmem [thread:$0]  %s186, 128, %s189, %s174
        $region20: #{tpu_custom_call.1} parent=15 // pred_fallthru
          _
        // Predicated region
        $region21: #{tpu_custom_call.1} parent=15 // pred_check
          %p192 = pneg %p89
        $region22: #{tpu_custom_call.1} parent=15 // pred_check_branch
          %194 = sbr.rel (%p192) target = $region24
        $region23: #{tpu_custom_call.1} parent=15 // pred_region
          %s195 = sand.u32 %s79, 1
          %s196 = scalar_lea.sflag [#allocation5], %s195
          %s197 = sand.u32 %s79, 1
          %s198 = smul.addr %s197, 8
          %s199 = scalar_lea.vmem [#allocation4], %s198
          %s200 = sadd.s32 %s24, %s25
          %s201 = smul.u32 2, %s200
          %s203 = ssub.s32 128, 128
          %204 = vsyncadd %s196, %s203
          %s205 = smul.addr %s23, 2
          %s206 = sadd.s32 %s201, %s205
          %s207 = smul.addr %s206, 64
          %s208 = scalar_lea.hbm %s1, %s207
          %s210 = sshll.u32 %s199, 4
          %s211 = int_to_ptr.vmem [resolvable:$true] %s210
          %213 = dma.hbm_to_vmem [thread:$0]  %s208, 128, %s211, %s196
        $region24: #{tpu_custom_call.1} parent=15 // pred_fallthru
          _
      $region16: #{tpu_custom_call.1} parent=5 // pred_fallthru
        _
      %p214 = scmp.le.s32.totalorder 1, %s16
      %p215 = scmp.lt.s32.totalorder %s16, 3
      %p216 = pnand %p214, %p215
      %p217 = pneg %p216
      // Predicated region
      $region25: #{tpu_custom_call.1} parent=5 // pred_check
        _
      $region26: #{tpu_custom_call.1} parent=5 // pred_check_branch
        %219 = sbr.rel (%p216) target = $region28
      $region27: #{tpu_custom_call.1} parent=5 // pred_region
        %s220 = ssub.s32 %s16, 1
        %s221 = sand.u32 %s52, 1
        %s222 = scalar_lea.sflag [#allocation3], %s221
        %s223 = sand.u32 %s52, 1
        %s224 = smul.addr %s223, 8
        %s225 = scalar_lea.vmem [#allocation2], %s224
        // Predicated region
        $region29: #{tpu_custom_call.1} parent=27 // pred_check
          %p226 = pneg %p65
        $region30: #{tpu_custom_call.1} parent=27 // pred_check_branch
          %228 = sbr.rel (%p226) target = $region32
        $region31: #{tpu_custom_call.1} parent=27 // pred_region
          %229 = dma.done %s222, 128
        $region32: #{tpu_custom_call.1} parent=27 // pred_fallthru
          _
        %s230 = sand.u32 %s82, 1
        %s231 = scalar_lea.sflag [#allocation5], %s230
        %s232 = sand.u32 %s82, 1
        %s233 = smul.addr %s232, 8
        %s234 = scalar_lea.vmem [#allocation4], %s233
        // Predicated region
        $region33: #{tpu_custom_call.1} parent=27 // pred_check
          %p235 = pneg %p95
        $region34: #{tpu_custom_call.1} parent=27 // pred_check_branch
          %237 = sbr.rel (%p235) target = $region36
        $region35: #{tpu_custom_call.1} parent=27 // pred_region
          %238 = dma.done %s231, 128
        $region36: #{tpu_custom_call.1} parent=27 // pred_fallthru
          _
        %s239 = sand.u32 %s52, 1
        %s240 = scalar_lea.sflag [#allocation3], %s239
        %s241 = sand.u32 %s52, 1
        %s242 = smul.addr %s241, 8
        %s243 = scalar_lea.vmem [#allocation2], %s242
        %p244 = pneg %p65
        %p245 = pneg %p62
        %s246 = sand.u32 %s82, 1
        %s247 = scalar_lea.sflag [#allocation5], %s246
        %s248 = sand.u32 %s82, 1
        %s249 = smul.addr %s248, 8
        %s250 = scalar_lea.vmem [#allocation4], %s249
        %p251 = pneg %p95
        %p252 = pneg %p92
        %p253 = pneg %p123
        %p254 = pneg %p120
        %p255 = scmp.lt.s32.totalorder %s26, 1
        %s256 = scalar_select %p255, %s26, 1
        %p257 = scmp.lt.s32.totalorder %s27, 0
        %s258 = scalar_select %p257, %s27, 0
        %s259 = sadd.s32 %s258, %s256
        %s260 = smul.addr %s259, 4
        %s261 = scalar_lea.vmem %s2, %s260
        %p262 = pneg %p151
        %p263 = pneg %p148
        %p264 = scmp.lt.s32.totalorder %s26, 1
        %s265 = scalar_select %p264, %s26, 1
        %p266 = scmp.lt.s32.totalorder %s27, 0
        %s267 = scalar_select %p266, %s27, 0
        %s268 = sadd.s32 %s267, %s265
        %s269 = smul.addr %s268, 4
        %s270 = scalar_lea.vmem %s3, %s269
        %s271 = sadd.s32 %s27, %s28
        %s272 = smul.u32 2, %s271
        %s273 = sadd.s32 %s27, %s28
        %s274 = smul.u32 2, %s273
        %p275 = scmp.lt.s32.totalorder %s26, 1
        %s276 = scalar_select %p275, %s26, 1
        %p277 = scmp.lt.s32.totalorder %s27, 0
        %s278 = scalar_select %p277, %s27, 0
        %s279 = sadd.s32 %s278, %s276
        %s280 = smul.addr %s279, 4
        %s281 = scalar_lea.vmem %s2, %s280
        %p282 = scmp.lt.s32.totalorder %s26, 1
        %s283 = scalar_select %p282, %s26, 1
        %p284 = scmp.lt.s32.totalorder %s27, 0
        %s285 = scalar_select %p284, %s27, 0
        %s286 = sadd.s32 %s285, %s283
        %s287 = smul.addr %s286, 4
        %s288 = scalar_lea.vmem %s3, %s287
        %p289 = scmp.eq.s32.totalorder %s28, 0
        // Predicated region
        $region37: #{tpu_custom_call.1} parent=27 // pred_check
          %p290 = pneg %p289
        $region38: #{tpu_custom_call.1} parent=27 // pred_check_branch
          %292 = sbr.rel (%p290) target = $region40
        $region39: #{tpu_custom_call.1} parent=27 // pred_region
          %vm293 = vcmask 3072
          %294 = vst.msk [vmem:[%s281] sm:$0xf] %vm293, 0.0
          %295 = vst.msk [vmem:[%s288] sm:$0xf] %vm293, 0.0
        $region40: #{tpu_custom_call.1} parent=27 // pred_fallthru
          _
        %v296 = vld [vmem:[%s225] sm:$0xff]
        %v297 = vmul.f32 %v296, 0.5
        %v298 = vtanh.pop %v297
        %v299 = vmul.f32 %v298, 0.5
        %v300 = vadd.f32 %v299, 0.5
        %v301 = vld [vmem:[%s234] sm:$0xff]
        %v302 = vld [vmem:[%s281] sm:$0xf]
        %v303 = vmul.f32 %v300, %v301
        %v305 = vcombine.high %v303, %v303
        %vm307 = vcmask 1043456
        %v308 = vsel %vm307, %v303, 0.0
        %v309 = vsel %vm307, %v305, 0.0
        %v310 = vadd.f32 %v308, %v309
        %311 = vadd.xlane.f32.xlu0 %v310
        %v312 = vpop.xlane.xlu0 %311
        %v313 = vadd.f32 %v302, %v312
        %vm314 = vcmask 3072
        %315 = vst.msk [vmem:[%s281] sm:$0xf] %vm314, %v313
        %v316 = vld [vmem:[%s288] sm:$0xf]
        %v317 = vadd.f32 %v300, %v301
        %v319 = vcombine.high %v317, %v317
        %v321 = vsel %vm307, %v317, 0.0
        %v322 = vsel %vm307, %v319, 0.0
        %v323 = vadd.f32 %v321, %v322
        %324 = vadd.xlane.f32.xlu0 %v323
        %v325 = vpop.xlane.xlu0 %324
        %v326 = vadd.f32 %v316, %v325
        %327 = vst.msk [vmem:[%s288] sm:$0xf] %vm314, %v326
        %p328 = scmp.lt.s32.totalorder %s26, 1
        %s329 = scalar_select %p328, %s26, 1
        %p330 = scmp.lt.s32.totalorder %s27, 0
        %s331 = scalar_select %p330, %s27, 0
        %s332 = sadd.s32 %s331, %s329
        %s333 = smul.addr %s332, 4
        %s334 = scalar_lea.vmem %s2, %s333
        %p335 = scmp.lt.s32.totalorder %s26, 1
        %s336 = scalar_select %p335, %s26, 1
        %p337 = scmp.lt.s32.totalorder %s27, 0
        %s338 = scalar_select %p337, %s27, 0
        %s339 = sadd.s32 %s338, %s336
        %s340 = smul.addr %s339, 4
        %s341 = scalar_lea.vmem %s3, %s340
        // Predicated region
        $region41: #{tpu_custom_call.1} parent=27 // pred_check
          %p342 = pneg %p120
        $region42: #{tpu_custom_call.1} parent=27 // pred_check_branch
          %344 = sbr.rel (%p342) target = $region44
        $region43: #{tpu_custom_call.1} parent=27 // pred_region
          _
        $region44: #{tpu_custom_call.1} parent=27 // pred_fallthru
          _
        // Predicated region
        $region45: #{tpu_custom_call.1} parent=27 // pred_check
          %p345 = pneg %p148
        $region46: #{tpu_custom_call.1} parent=27 // pred_check_branch
          %347 = sbr.rel (%p345) target = $region48
        $region47: #{tpu_custom_call.1} parent=27 // pred_region
          _
        $region48: #{tpu_custom_call.1} parent=27 // pred_fallthru
          _
      $region28: #{tpu_custom_call.1} parent=5 // pred_fallthru
        _
      %p348 = scmp.le.s32.totalorder 2, %s16
      // Predicated region
      $region49: #{tpu_custom_call.1} parent=5 // pred_check
        %p349 = pneg %p348
      $region50: #{tpu_custom_call.1} parent=5 // pred_check_branch
        %351 = sbr.rel (%p349) target = $region52
      $region51: #{tpu_custom_call.1} parent=5 // pred_region
        %s352 = ssub.s32 %s16, 2
        // Predicated region
        $region53: #{tpu_custom_call.1} parent=51 // pred_check
          %p353 = pneg %p126
        $region54: #{tpu_custom_call.1} parent=51 // pred_check_branch
          %355 = sbr.rel (%p353) target = $region56
        $region55: #{tpu_custom_call.1} parent=51 // pred_region
          %p356 = scmp.lt.s32.totalorder %s29, 1
          %s357 = scalar_select %p356, %s29, 1
          %p358 = scmp.lt.s32.totalorder %s30, 0
          %s359 = scalar_select %p358, %s30, 0
          %s360 = sadd.s32 %s359, %s357
          %s361 = smul.addr %s360, 4
          %s362 = scalar_lea.vmem %s2, %s361
        $region56: #{tpu_custom_call.1} parent=51 // pred_fallthru
          _
        // Predicated region
        $region57: #{tpu_custom_call.1} parent=51 // pred_check
          %p363 = pneg %p154
        $region58: #{tpu_custom_call.1} parent=51 // pred_check_branch
          %365 = sbr.rel (%p363) target = $region60
        $region59: #{tpu_custom_call.1} parent=51 // pred_region
          %p366 = scmp.lt.s32.totalorder %s29, 1
          %s367 = scalar_select %p366, %s29, 1
          %p368 = scmp.lt.s32.totalorder %s30, 0
          %s369 = scalar_select %p368, %s30, 0
          %s370 = sadd.s32 %s369, %s367
          %s371 = smul.addr %s370, 4
          %s372 = scalar_lea.vmem %s3, %s371
        $region60: #{tpu_custom_call.1} parent=51 // pred_fallthru
          _
      $region52: #{tpu_custom_call.1} parent=5 // pred_fallthru
        _
    $region6: #{tpu_custom_call.1} parent=1 // loop_footer
      %s20 = sadd.s32 1, %s16
    $region7: #{tpu_custom_call.1} parent=1 // loop_footer_branch
      %15 = sbr.rel target = $region3
    $region8: #{tpu_custom_call.1} parent=1 // loop_exit
      _
    %373 = vsyncpa [#allocation3], 1
    %s374 = scalar_lea.sflag [#allocation3], 1
    %375 = vsyncpa %s374, 1
    %376 = vsyncpa [#allocation5], 1
    %s377 = scalar_lea.sflag [#allocation5], 1
    %378 = vsyncpa %s377, 1

</llo_original>
